<compile_context>
chip_gen: v6e
topology: v6e:2x2x1
jax: 0.10.0
libtpu: 0.0.40
codegen_flags: <defaults>
</compile_context>

<pallas_src>
import functools
import math

import jax
import jax.numpy as jnp
from jax.experimental import pallas as pl
from jax.experimental.pallas import tpu as pltpu

_LOG_CLAMP = math.log(1e-6)  # clamp(p, 1e-6, 1.0) -> max(logp, log(1e-6))


def _round_up(x, m):
    return -(-x // m) * m


def _vmem_capacity_bytes():
    try:
        return int(pltpu.get_tpu_info().vmem_capacity_bytes)
    except Exception:
        return 64 << 20  # conservative fallback (v7x per-TC VMEM)


# --------------------------------------------------------------------------- #
# Kernels
# --------------------------------------------------------------------------- #
def _ce_loss_rows_kernel(pred_ref, labels_ref, *rest,
                         inv_t, n_total, tile_n, has_weight):
    """General path: block (tile_n, C), classes on lanes, softmax over lanes."""
    if has_weight:
        weight_ref, out_ref = rest
    else:
        (out_ref,) = rest

    x = pred_ref[...].astype(jnp.float32) * jnp.float32(inv_t)
    m = jnp.max(x, axis=1, keepdims=True)
    s = jnp.sum(jnp.exp(x - m), axis=1, keepdims=True)
    logp = jnp.maximum((x - m) - jnp.log(s), jnp.float32(_LOG_CLAMP))

    # Reduce to (tile_n, 1) first, then apply the cheap weight / ragged-mask ops.
    row = jnp.sum(logp * labels_ref[...].astype(jnp.float32), axis=1, keepdims=True)
    if has_weight:
        row = row * weight_ref[...].astype(jnp.float32)
    if n_total % tile_n != 0:  # ragged last tile; select also squashes OOB NaNs
        rows = jax.lax.broadcasted_iota(jnp.int32, (tile_n, 1), 0)
        limit = n_total - pl.program_id(0) * tile_n
        row = jnp.where(rows < limit, row, jnp.float32(0.0))

    # Lane-dense (1, 128) partial-sum block (wrapper reads column 0).
    out_ref[...] = jnp.broadcast_to(jnp.sum(row), (1, 128)).astype(jnp.float32)


def _ce_loss_cols_kernel(pred_ref, labels_ref, *rest,
                         inv_t, n_total, tile_b, has_weight):
    """Small-C path: block (C, tile_b), batch on lanes, softmax over sublanes."""
    if has_weight:
        weight_ref, out_ref = rest
    else:
        (out_ref,) = rest

    x = pred_ref[...].astype(jnp.float32) * jnp.float32(inv_t)        # (C, tile_b)
    m = jnp.max(x, axis=0, keepdims=True)
    s = jnp.sum(jnp.exp(x - m), axis=0, keepdims=True)
    logp = jnp.maximum((x - m) - jnp.log(s), jnp.float32(_LOG_CLAMP))

    col = jnp.sum(logp * labels_ref[...].astype(jnp.float32), axis=0, keepdims=True)
    if has_weight:
        col = col * weight_ref[...].astype(jnp.float32)               # (1, tile_b)
    if n_total % tile_b != 0:
        cols = jax.lax.broadcasted_iota(jnp.int32, (1, tile_b), 1)
        limit = n_total - pl.program_id(0) * tile_b
        col = jnp.where(cols < limit, col, jnp.float32(0.0))

    out_ref[...] = jnp.broadcast_to(jnp.sum(col), (1, 128)).astype(jnp.float32)


# --------------------------------------------------------------------------- #
# Tile sizing (padded-byte aware, double-buffer aware)
# --------------------------------------------------------------------------- #
def _pick_tile_n(c, pred_is, labels_is, has_weight, budget_bytes,
                 target_pred_bytes=8 << 20):
    c_pad = _round_up(c, 128)                                  # lane padding
    per_row = c_pad * (pred_is + labels_is) + (128 * 4 if has_weight else 0)
    rows_budget = budget_bytes // (2 * max(per_row, 1))        # 2 = double buffer
    rows_target = max(1, target_pred_bytes // max(c_pad * pred_is, 1))
    # TODO(synk): rows_budget < 8 means vocab-scale C; needs a class-axis grid.
    return int(max(8, min(rows_budget, rows_target)))


def _pick_tile_b(c, pred_is, labels_is, has_weight, budget_bytes,
                 target_pred_bytes=8 << 20):
    c_pad = _round_up(c, 32)                                   # sublane padding (cons.)
    per_col = c_pad * (pred_is + labels_is) + (8 * 4 if has_weight else 0)
    cols_budget = budget_bytes // (2 * max(per_col, 1))
    cols_target = max(1, target_pred_bytes // max(c_pad * pred_is, 1))
    return int(max(128, min(cols_budget, cols_target)))


# --------------------------------------------------------------------------- #
# Wrapper
# --------------------------------------------------------------------------- #
def ce_loss(pred, labels, weight=None, t=1.0, tile=None, vmem_budget=None,
            small_c_threshold=32):
    """Pallas equivalent of CELoss.forward. pred/labels: (N, C); weight: (N,) or None."""
    n, c = pred.shape
    has_weight = weight is not None
    pred_is = pred.dtype.itemsize
    labels_is = labels.dtype.itemsize

    vmem_cap = _vmem_capacity_bytes()
    if vmem_budget is None:
        vmem_budget = vmem_cap // 4
    limit_cap = (vmem_cap * 3) // 4                 # headroom for scratch / outputs

    cost = pl.CostEstimate(
        flops=int(10 * n * c),
        transcendentals=int(n * c + n),
        bytes_accessed=int(n * c * (pred_is + labels_is) + (4 * n if has_weight else 0)),
    )

    inv_t = 1.0 / float(t)
    use_lane_major = c <= small_c_threshold

    if use_lane_major:
        # ----- small-C path: classes on sublanes, batch on lanes ----- #
        pred_in = jnp.transpose(pred)               # (C, N)
        labels_in = jnp.transpose(labels)           # (C, N)
        tile_b = tile if tile is not None else _pick_tile_b(
            c, pred_is, labels_is, has_weight, vmem_budget)
        if tile_b < n:
            tile_b = max(128, tile_b - tile_b % 128)
        if tile_b >= n:
            tile_b = n                              # single full-extent tile
        num_tiles = -(-n // tile_b)

        in_specs = [pl.BlockSpec((c, tile_b), lambda i: (0, i)),
                    pl.BlockSpec((c, tile_b), lambda i: (0, i))]
        args = [pred_in, labels_in]
        if has_weight:
            in_specs.append(pl.BlockSpec((1, tile_b), lambda i: (0, i)))
            args.append(jnp.asarray(weight, dtype=jnp.float32).reshape(1, n))

        tb_pad = _round_up(tile_b, 128)
        tile_bytes = tb_pad * _round_up(c, 32) * (pred_is + labels_is)
        if has_weight:
            tile_bytes += tb_pad * 8 * 4

        kernel = functools.partial(_ce_loss_cols_kernel, inv_t=inv_t, n_total=n,
                                   tile_b=tile_b, has_weight=has_weight)
    else:
        # ----- general path: classes on lanes ----- #
        row_align = 8 if min(pred_is, labels_is) >= 4 else 32   # sub-32-bit packing
        tile_n = tile if tile is not None else _pick_tile_n(
            c, pred_is, labels_is, has_weight, vmem_budget)
        if tile_n < n:
            tile_n = max(row_align, tile_n - tile_n % row_align)
        if tile_n >= n:
            tile_n = n                              # single full-extent tile
        num_tiles = -(-n // tile_n)

        in_specs = [pl.BlockSpec((tile_n, c), lambda i: (i, 0)),
                    pl.BlockSpec((tile_n, c), lambda i: (i, 0))]
        args = [pred, labels]
        if has_weight:
            in_specs.append(pl.BlockSpec((tile_n, 1), lambda i: (i, 0)))
            args.append(jnp.asarray(weight, dtype=jnp.float32).reshape(n, 1))

        tn_pad = _round_up(tile_n, 8)
        tile_bytes = tn_pad * _round_up(c, 128) * (pred_is + labels_is)
        if has_weight:
            tile_bytes += tn_pad * 128 * 4

        kernel = functools.partial(_ce_loss_rows_kernel, inv_t=inv_t, n_total=n,
                                   tile_n=tile_n, has_weight=has_weight)

    vmem_limit = int(min(limit_cap, max(16 << 20, 2 * tile_bytes + (4 << 20))))

    partials = pl.pallas_call(
        kernel,
        out_shape=jax.ShapeDtypeStruct((num_tiles, 128), jnp.float32),
        grid=(num_tiles,),
        in_specs=in_specs,
        out_specs=pl.BlockSpec((1, 128), lambda i: (i, 0)),
        compiler_params=pltpu.CompilerParams(
            dimension_semantics=("parallel",),   # independent tiles
            vmem_limit_bytes=vmem_limit,
        ),
        cost_estimate=cost,
    )(*args)

    return -jnp.sum(partials[:, 0]) / jnp.float32(n)


# --------------------------------------------------------------------------- #
# Pure-JAX reference mirroring the PyTorch module
# --------------------------------------------------------------------------- #
def _ce_loss_ref(pred, labels, weight=None, t=1.0):
    p = jax.nn.softmax(pred.astype(jnp.float32) / t, axis=1)
    p = jnp.clip(p, 1e-6, 1.0)
    if weight is None:
        return -jnp.sum(jnp.log(p) * labels) / pred.shape[0]
    return -jnp.sum(jnp.log(p) * labels * weight[:, None].astype(jnp.float32)) / pred.shape[0]


if __name__ == "__main__":
    num_classes = 5
    batch = 8

    key = jax.random.PRNGKey(0)
    k1, k2, k3, k4, k5, k6, k7 = jax.random.split(key, 7)

    pred = jax.random.normal(k1, (batch, num_classes), dtype=jnp.float32)
    label_ids = jax.random.randint(k2, (batch,), 0, num_classes)
    labels = jax.nn.one_hot(label_ids, num_classes, dtype=jnp.float32)
    weight = jax.random.uniform(k3, (batch,), dtype=jnp.float32) + 0.5

    # small-C lane-major path, no weight
    loss = jax.block_until_ready(ce_loss(pred, labels, weight=None, t=1.0))
    ref = _ce_loss_ref(pred, labels, weight=None, t=1.0)
    assert jnp.allclose(loss, ref, rtol=1e-5, atol=1e-5), (loss, ref)

    # small-C lane-major path, weighted, custom temperature
    loss_w = jax.block_until_ready(ce_loss(pred, labels, weight=weight, t=2.0))
    ref_w = _ce_loss_ref(pred, labels, weight=weight, t=2.0)
    assert jnp.allclose(loss_w, ref_w, rtol=1e-5, atol=1e-5), (loss_w, ref_w)

    # small-C lane-major, multi-tile with ragged last tile (N not multiple of tile)
    n2 = 200
    pred2 = jax.random.normal(k4, (n2, num_classes), dtype=jnp.float32)
    labels2 = jax.nn.one_hot(
        jax.random.randint(k5, (n2,), 0, num_classes), num_classes, dtype=jnp.float32)
    loss2 = jax.block_until_ready(ce_loss(pred2, labels2, weight=None, t=1.0, tile=128))
    ref2 = _ce_loss_ref(pred2, labels2, weight=None, t=1.0)
    assert jnp.allclose(loss2, ref2, rtol=1e-5, atol=1e-5), (loss2, ref2)

    # general row-major path (C > threshold), weighted, multi-tile ragged batch
    n3, c3 = 20, 160
    pred3 = jax.random.normal(k6, (n3, c3), dtype=jnp.float32)
    labels3 = jax.nn.one_hot(
        jax.random.randint(k7, (n3,), 0, c3), c3, dtype=jnp.float32)
    w3 = jax.random.uniform(k3, (n3,), dtype=jnp.float32) + 0.5
    loss3 = jax.block_until_ready(ce_loss(pred3, labels3, weight=w3, t=1.5, tile=8))
    ref3 = _ce_loss_ref(pred3, labels3, weight=w3, t=1.5)
    assert jnp.allclose(loss3, ref3, rtol=1e-5, atol=1e-5), (loss3, ref3)

    print("KERNEL_OK")
</pallas_src>

<mosaic_0001>
module attributes {stable_mosaic.version = 11 : i64} {
  func.func @_ce_loss_cols_kernel(%arg0: i32, %arg1: memref<5x8xf32, #tpu.memory_space<vmem>>, %arg2: memref<5x8xf32, #tpu.memory_space<vmem>>, %arg3: memref<1x128xf32, #tpu.memory_space<vmem>>) attributes {dimension_semantics = [#tpu.dimension_semantics<parallel>], iteration_bounds = array<i64: 1>, scalar_prefetch = 0 : i64, scratch_operands = 0 : i64, tpu.core_type = #tpu.core_type<tc>, window_params = [{transform_indices = @transform_0, window_bounds = array<i64: 5, 8>}, {transform_indices = @transform_1, window_bounds = array<i64: 5, 8>}, {transform_indices = @transform_2, window_bounds = array<i64: 1, 128>}]} {
    %c0 = arith.constant 0 : index
    %c0_0 = arith.constant 0 : index
    %0 = vector.load %arg1[%c0, %c0_0] : memref<5x8xf32, #tpu.memory_space<vmem>>, vector<5x8xf32>
    %cst = arith.constant 1.000000e+00 : f32
    %1 = vector.broadcast %cst : f32 to vector<5x8xf32>
    %2 = arith.mulf %0, %1 : vector<5x8xf32>
    %cst_1 = arith.constant dense<0xFF800000> : vector<8xf32>
    %3 = vector.multi_reduction <maximumf>, %2, %cst_1 [0] : vector<5x8xf32> to vector<8xf32>
    %4 = vector.shape_cast %3 : vector<8xf32> to vector<1x8xf32>
    %5 = vector.broadcast %4 : vector<1x8xf32> to vector<5x8xf32>
    %6 = arith.subf %2, %5 : vector<5x8xf32>
    %7 = math.exp %6 : vector<5x8xf32>
    %cst_2 = arith.constant dense<0.000000e+00> : vector<8xf32>
    %8 = vector.multi_reduction <add>, %7, %cst_2 [0] : vector<5x8xf32> to vector<8xf32>
    %9 = vector.shape_cast %8 : vector<8xf32> to vector<1x8xf32>
    %10 = vector.broadcast %4 : vector<1x8xf32> to vector<5x8xf32>
    %11 = arith.subf %2, %10 : vector<5x8xf32>
    %12 = math.log %9 : vector<1x8xf32>
    %13 = vector.broadcast %12 : vector<1x8xf32> to vector<5x8xf32>
    %14 = arith.subf %11, %13 : vector<5x8xf32>
    %cst_3 = arith.constant -13.8155107 : f32
    %15 = vector.broadcast %cst_3 : f32 to vector<5x8xf32>
    %16 = arith.maximumf %14, %15 : vector<5x8xf32>
    %c0_4 = arith.constant 0 : index
    %c0_5 = arith.constant 0 : index
    %17 = vector.load %arg2[%c0_4, %c0_5] : memref<5x8xf32, #tpu.memory_space<vmem>>, vector<5x8xf32>
    %18 = arith.mulf %16, %17 : vector<5x8xf32>
    %cst_6 = arith.constant dense<0.000000e+00> : vector<8xf32>
    %19 = vector.multi_reduction <add>, %18, %cst_6 [0] : vector<5x8xf32> to vector<8xf32>
    %20 = vector.shape_cast %19 : vector<8xf32> to vector<1x8xf32>
    %21 = vector.shape_cast %20 : vector<1x8xf32> to vector<1x1x8xf32>
    %cst_7 = arith.constant dense<0.000000e+00> : vector<1xf32>
    %22 = vector.multi_reduction <add>, %21, %cst_7 [1, 2] : vector<1x1x8xf32> to vector<1xf32>
    %23 = vector.shape_cast %22 : vector<1xf32> to vector<1x1x1xf32>
    %24 = vector.extract %23[0, 0, 0] : f32 from vector<1x1x1xf32>
    %25 = vector.broadcast %24 : f32 to vector<1x128xf32>
    %c0_8 = arith.constant 0 : index
    %c0_9 = arith.constant 0 : index
    %26 = vector.load %arg3[%c0_8, %c0_9] : memref<1x128xf32, #tpu.memory_space<vmem>>, vector<1x128xf32>
    tpu.vector_store %arg3[%c0_8, %c0_9], %25 {strides = array<i32>} : memref<1x128xf32, #tpu.memory_space<vmem>>, vector<1x128xf32>,
    return
  }
  func.func @transform_0(%arg0: i32) -> (i32, i32) {
    %c0_i32 = arith.constant 0 : i32
    %c0_i32_0 = arith.constant 0 : i32
    return %c0_i32, %arg0 : i32, i32
  }
  func.func @transform_1(%arg0: i32) -> (i32, i32) {
    %c0_i32 = arith.constant 0 : i32
    %c0_i32_0 = arith.constant 0 : i32
    return %c0_i32, %arg0 : i32, i32
  }
  func.func @transform_2(%arg0: i32) -> (i32, i32) {
    %c0_i32 = arith.constant 0 : i32
    %c0_i32_0 = arith.constant 0 : i32
    return %arg0, %c0_i32 : i32, i32
  }
}

</mosaic_0001>

<llo_original>
// kernel: tpu_custom_call.1
$region0: #{tpu_custom_call.1}
  #allocation0 [shape = 'u32[]', space=smem, size = 0x4, offset = 0x4, fixed_abs, tag = 'smem constant byte address 0x4 - core index']
  #allocation1 [shape = 'u32[144,128]{1,0:T(1,128)}', space=vmem, size = 0x12000, scoped, tag = 'internal scratch']
  %s0 = inlined_call_operand.hbm [shape: f32[5,8], index: 0, kind: input, shape index: {}]
  %s1 = inlined_call_operand.hbm [shape: f32[5,8], index: 1, kind: input, shape index: {}]
  %s2 = inlined_call_operand.hbm [shape: f32[1,128], index: 2, kind: output, shape index: {}]
  %s3 = sld [smem:[#allocation0]]
  $region26: #{tpu_custom_call.1} parent=0
    _
  %s5 = ssub.s32 1, %s3
  %s6 = scalar_select 0, %s5, %s3
  $region1: #{tpu_custom_call.1} parent=0
    #allocation2 [shape = 'u8[4096]{0}', space=vmem, size = 0x1000, scoped, tag = 'input window, operand 0, single buffered']
    #allocation3 [shape = 's32[1]{0}', space=sflag, size = 0x4, scoped, tag = 'scoped memory for tpu_custom_call.1']
    #allocation4 [shape = 's32[1]{0}', space=sflag, size = 0x4, scoped, tag = 'scoped memory for tpu_custom_call.1']
    #allocation5 [shape = 'u8[4096]{0}', space=vmem, size = 0x1000, scoped, tag = 'input window, operand 1, single buffered']
    #allocation6 [shape = 's32[1]{0}', space=sflag, size = 0x4, scoped, tag = 'scoped memory for tpu_custom_call.1']
    #allocation7 [shape = 'u8[512]{0}', space=vmem, size = 0x400, scoped, tag = 'output window, operand 0, single buffered']
    %7 = vsyncpa [#allocation3], 0
    %8 = vsyncpa [#allocation6], 0
    %9 = vsyncpa [#allocation4], 0
    // Predicated region
    $region2: #{tpu_custom_call.1} parent=1 // pred_check
      _
    $region3: #{tpu_custom_call.1} parent=1 // pred_check_branch
      %11 = sbr.rel (0) target = $region5
    $region4: #{tpu_custom_call.1} parent=1 // pred_region
      %s13 = ssub.s32 128, 128
      %14 = vsyncadd [#allocation3], %s13
      %s16 = sshll.u32 [#allocation2], 4
      %s17 = int_to_ptr.vmem [resolvable:$true] %s16
      %19 = dma.hbm_to_vmem [thread:$0]  %s0, 128, %s17, [#allocation3]
    $region5: #{tpu_custom_call.1} parent=1 // pred_fallthru
      _
    // Predicated region
    $region6: #{tpu_custom_call.1} parent=1 // pred_check
      _
    $region7: #{tpu_custom_call.1} parent=1 // pred_check_branch
      %21 = sbr.rel (0) target = $region9
    $region8: #{tpu_custom_call.1} parent=1 // pred_region
      %s23 = ssub.s32 128, 128
      %24 = vsyncadd [#allocation6], %s23
      %s26 = sshll.u32 [#allocation5], 4
      %s27 = int_to_ptr.vmem [resolvable:$true] %s26
      %29 = dma.hbm_to_vmem [thread:$0]  %s1, 128, %s27, [#allocation6]
    $region9: #{tpu_custom_call.1} parent=1 // pred_fallthru
      _
    // Predicated region
    $region10: #{tpu_custom_call.1} parent=1 // pred_check
      _
    $region11: #{tpu_custom_call.1} parent=1 // pred_check_branch
      %31 = sbr.rel (0) target = $region13
    $region12: #{tpu_custom_call.1} parent=1 // pred_region
      %32 = dma.done [#allocation3], 128
    $region13: #{tpu_custom_call.1} parent=1 // pred_fallthru
      _
    // Predicated region
    $region14: #{tpu_custom_call.1} parent=1 // pred_check
      _
    $region15: #{tpu_custom_call.1} parent=1 // pred_check_branch
      %34 = sbr.rel (0) target = $region17
    $region16: #{tpu_custom_call.1} parent=1 // pred_region
      %35 = dma.done [#allocation6], 128
    $region17: #{tpu_custom_call.1} parent=1 // pred_fallthru
      _
    %v36 = vld [vmem:[#allocation2] sm:$0x1f]
    %vm37 = vcmask 61440
    %v38 = vsel %vm37, %v36, -inf
    %v39 = vrot.slane %v38, 4
    %v40 = vmax.f32 %v38, %v39
    %v41 = vrot.slane %v40, 2
    %v42 = vmax.f32 %v40, %v41
    %v43 = vrot.slane %v42, 1
    %v44 = vmax.f32 %v42, %v43
    %v45 = vsub.f32 %v36, %v44
    %v46 = vmul.f32 %v45, 1.442695
    %v47 = vpow.pop %v46
    %v48 = vsel %vm37, %v47, 0.0
    %v49 = vrot.slane %v48, 4
    %v50 = vadd.f32 %v48, %v49
    %v51 = vrot.slane %v50, 2
    %v52 = vadd.f32 %v50, %v51
    %v53 = vrot.slane %v52, 1
    %v54 = vadd.f32 %v52, %v53
    %v55 = vlog2.pop %v54
    %v56 = vmul.f32 %v55, 0.6931472
    %v57 = vsub.f32 %v45, %v56
    %v58 = vmax.f32 %v57, -13.815511
    %v59 = vld [vmem:[#allocation5] sm:$0x1f]
    %v60 = vmul.f32 %v58, %v59
    %v61 = vsel %vm37, %v60, 0.0
    %v62 = vrot.slane %v61, 4
    %v63 = vadd.f32 %v61, %v62
    %v64 = vrot.slane %v63, 2
    %v65 = vadd.f32 %v63, %v64
    %v66 = vrot.slane %v65, 1
    %v67 = vadd.f32 %v65, %v66
    %vm68 = vcmask 57344
    %v69 = vsel %vm68, %v67, 0.0
    %70 = vadd.xlane.f32.xlu0 %v69
    %v71 = vpop.xlane.xlu0 %70
    %v72 = vrot.slane %v71, 4
    %v73 = vadd.f32 %v71, %v72
    %v74 = vrot.slane %v73, 2
    %v75 = vadd.f32 %v73, %v74
    %v76 = vrot.slane %v75, 1
    %v77 = vadd.f32 %v75, %v76
    %s78 = vtos %v77
    %v79 = vstv %s78
    %80 = vst [vmem:[#allocation7] sm:$0x1] %v79
    // Predicated region
    $region18: #{tpu_custom_call.1} parent=1 // pred_check
      _
    $region19: #{tpu_custom_call.1} parent=1 // pred_check_branch
      %82 = sbr.rel (0) target = $region21
    $region20: #{tpu_custom_call.1} parent=1 // pred_region
      %s84 = ssub.s32 16, 16
      %85 = vsyncadd [#allocation4], %s84
      %s87 = sshll.u32 [#allocation7], 4
      %s88 = int_to_ptr.vmem [resolvable:$true] %s87
      %90 = dma.vmem_to_hbm [thread:$0]  %s88, 16, %s2, [#allocation4]
    $region21: #{tpu_custom_call.1} parent=1 // pred_fallthru
      _
    // Predicated region
    $region22: #{tpu_custom_call.1} parent=1 // pred_check
      _
    $region23: #{tpu_custom_call.1} parent=1 // pred_check_branch
      %92 = sbr.rel (0) target = $region25
    $region24: #{tpu_custom_call.1} parent=1 // pred_region
      %93 = dma.done [#allocation4], 16
    $region25: #{tpu_custom_call.1} parent=1 // pred_fallthru
      _
    %94 = vsyncpa [#allocation3], 1
    %95 = vsyncpa [#allocation6], 1
    %96 = vsyncpa [#allocation4], 1

</llo_original>
